<compile_context>
chip_gen: v6e
topology: v6e:2x2x1
jax: 0.10.0
libtpu: 0.0.40
codegen_flags: <defaults>
</compile_context>

<pallas_src>
import functools

import jax
import jax.numpy as jnp
from jax import lax
from jax.experimental import pallas as pl
from jax.experimental.pallas import tpu as pltpu


# ---------------------------------------------------------------------------
# Generation-aware VMEM budgeting
# ---------------------------------------------------------------------------
def _physical_vmem_bytes():
    """Physical VMEM per core; falls back to the smallest (v7x, 64 MiB)."""
    try:
        fn = getattr(pltpu, "get_tpu_info", None)
        if fn is not None:
            info = fn()
            for name in ("vmem_capacity_bytes", "vmem_size_bytes", "vmem_bytes"):
                v = getattr(info, name, None)
                if v:
                    return int(v)
    except Exception:
        pass
    return 64 << 20


_PHYS_VMEM = _physical_vmem_bytes()
_VMEM_LIMIT = int(_PHYS_VMEM * 0.8)    # explicit scoped limit (>> 16/32 MiB defaults)
_TILE_BUDGET = int(_PHYS_VMEM * 0.4)   # what blocks + scratch are allowed to consume


def _pick_lane_tile(n, cap):
    """Largest multiple-of-128 divisor of n that is <= cap, else the full dim.

    Satisfies the Mosaic (8,128) block constraint: a lane-dim block must be a
    multiple of 128 or equal to the full array extent.
    """
    if n <= cap or n % 128 != 0:
        return n
    t = (cap // 128) * 128
    while t >= 128:
        if n % t == 0:
            return t
        t -= 128
    return n


# ---------------------------------------------------------------------------
# Projection kernel: (C, C) directions @ (C, HW) features, tiled over HW
# ---------------------------------------------------------------------------
def _proj_kernel(dirs_ref, x_ref, o_ref, *, mxu_dtype):
    # dirs: (C, C) resident f32; x block: (1, C, tHW) f32; out block: (1, C, tHW).
    # Cast to the MXU dtype *inside* the kernel (no bf16 HBM copy of x).
    d = dirs_ref[...].astype(mxu_dtype)
    x = x_ref[0].astype(mxu_dtype)
    # proj[c, p] = sum_k dirs[c, k] * x[k, p]   (MXU, lane dim = HW -> dense vst)
    o_ref[0] = lax.dot_general(
        d, x,
        dimension_numbers=(((1,), (0,)), ((), ())),
        preferred_element_type=jnp.float32,
    ).astype(o_ref.dtype)


def _proj_lane_cap(C, out_bytes, mxu_bytes):
    # dirs: double-buffered f32 blocks + in-kernel mxu-dtype temp.
    fixed = C * C * (2 * 4 + mxu_bytes)
    # per output lane: 2x f32 x block, 2x out block, mxu-dtype x temp, f32 dot result.
    per_lane = C * (2 * 4 + 2 * out_bytes + mxu_bytes + 4)
    cap = (_TILE_BUDGET - fixed) // max(per_lane, 1)
    return int(max(128, min(2048, (cap // 128) * 128)))


def sliced_projection(x_bc_hw, directions):
    """x: (B, C, HW) f32, directions: (C, C) f32 -> (B, C, HW) (= dirs @ x per batch).

    Output dtype is bf16 when C >= 128 (halves downstream sort/MSE HBM passes),
    f32 otherwise.
    """
    B, C, HW = x_bc_hw.shape
    use_bf16 = C >= 128
    mxu_dtype = jnp.bfloat16 if use_bf16 else jnp.float32
    out_dtype = jnp.bfloat16 if use_bf16 else jnp.float32
    out_bytes = jnp.dtype(out_dtype).itemsize
    mxu_bytes = jnp.dtype(mxu_dtype).itemsize

    t_hw = _pick_lane_tile(HW, cap=_proj_lane_cap(C, out_bytes, mxu_bytes))
    n_hw = HW // t_hw

    flops = 2 * B * C * C * HW
    bytes_accessed = int(C * C * 4 + B * C * HW * 4 + B * C * HW * out_bytes)

    return pl.pallas_call(
        functools.partial(_proj_kernel, mxu_dtype=mxu_dtype),
        out_shape=jax.ShapeDtypeStruct((B, C, HW), out_dtype),
        grid=(B, n_hw),
        in_specs=[
            pl.BlockSpec((C, C), lambda b, j: (0, 0)),         # stays resident
            pl.BlockSpec((1, C, t_hw), lambda b, j: (b, 0, j)),
        ],
        out_specs=pl.BlockSpec((1, C, t_hw), lambda b, j: (b, 0, j)),
        compiler_params=pltpu.CompilerParams(
            dimension_semantics=("parallel", "parallel"),
            vmem_limit_bytes=_VMEM_LIMIT),
        cost_estimate=pl.CostEstimate(
            flops=flops, transcendentals=0, bytes_accessed=bytes_accessed),
    )(directions.astype(jnp.float32), x_bc_hw)


# ---------------------------------------------------------------------------
# Streaming MSE vs. repeat_interleaved target (expansion done in-kernel on MXU)
# ---------------------------------------------------------------------------
def _mse_expand_kernel(cur_ref, tgt_ref, o_ref, acc_ref, *, inv_n, rr, mxu_dtype):
    j = pl.program_id(1)

    @pl.when(j == 0)                       # per-batch init (batch axis is parallel)
    def _():
        acc_ref[...] = jnp.zeros_like(acc_ref)

    k_tile = tgt_ref.shape[-1]
    t_tile = cur_ref.shape[-1]

    # 0/1 repeat_interleave expansion matrix generated in-kernel (VPU filler in a
    # mem-bound kernel): e[k, p] = 1 iff p // rr == k.  Exact in bf16 (values 0/1).
    col = lax.broadcasted_iota(jnp.int32, (k_tile, t_tile), 1) // rr
    row = lax.broadcasted_iota(jnp.int32, (k_tile, t_tile), 0)
    e = (col == row).astype(mxu_dtype)

    # Expand the (C, K) target tile to (C, K*rr) repeat-interleaved on the MXU.
    t_exp = jnp.dot(tgt_ref[0].astype(mxu_dtype), e,
                    preferred_element_type=jnp.float32)
    d = cur_ref[0].astype(jnp.float32) - t_exp
    acc_ref[...] = acc_ref[...] + d * d    # pure VPU carried op (no per-step reduce)

    @pl.when(j == pl.num_programs(1) - 1)  # per-batch finalize: single reduce
    def _():
        o_ref[0] = jnp.sum(acc_ref[...], keepdims=True) * inv_n


def _mse_k_cap(C, rr, io_bytes, mxu_bytes):
    cap = 512
    while cap > 128:
        t = cap * rr
        usage = (2 * C * t * io_bytes        # cur, double-buffered
                 + 2 * C * cap * io_bytes    # target, double-buffered
                 + C * t * 4                 # f32 accumulator scratch
                 + cap * t * mxu_bytes       # in-kernel expansion matrix temp
                 + 2 * C * t * 4)            # t_exp / d f32 temps
        if usage <= _TILE_BUDGET:
            break
        cap -= 128
    return cap


def mse_vs_expanded_target(cur, target, rr):
    """mean((cur - repeat_interleave(target, rr, axis=-1))**2), streamed in tiles.

    cur:    (B, C, T_total) with T_total = K_total * rr
    target: (B, C, K_total) stored UN-repeated; expansion done in-kernel.
    """
    B, C, T_total = cur.shape
    K_total = target.shape[-1]
    assert T_total == K_total * rr, (T_total, K_total, rr)

    io_bytes = jnp.dtype(cur.dtype).itemsize
    mxu_dtype = jnp.bfloat16 if target.dtype == jnp.bfloat16 else jnp.float32
    mxu_bytes = jnp.dtype(mxu_dtype).itemsize

    k_tile = _pick_lane_tile(K_total, cap=_mse_k_cap(C, rr, io_bytes, mxu_bytes))
    t_tile = k_tile * rr
    n_tiles = K_total // k_tile

    inv_n = 1.0 / float(B * C * T_total)
    flops = 2 * B * C * K_total * t_tile + 3 * B * C * T_total
    bytes_accessed = int(cur.size * io_bytes + target.size * io_bytes + B * 4)

    out = pl.pallas_call(
        functools.partial(_mse_expand_kernel, inv_n=inv_n, rr=rr,
                          mxu_dtype=mxu_dtype),
        out_shape=jax.ShapeDtypeStruct((B, 1, 1), jnp.float32),
        grid=(B, n_tiles),
        in_specs=[
            pl.BlockSpec((1, C, t_tile), lambda b, j: (b, 0, j)),  # cur tile
            pl.BlockSpec((1, C, k_tile), lambda b, j: (b, 0, j)),  # target tile
        ],
        out_specs=pl.BlockSpec((1, 1, 1), lambda b, j: (b, 0, 0)),
        scratch_shapes=[pltpu.VMEM((C, t_tile), jnp.float32)],
        compiler_params=pltpu.CompilerParams(
            dimension_semantics=("parallel", "arbitrary"),  # batch parallel (v7x)
            vmem_limit_bytes=_VMEM_LIMIT),
        cost_estimate=pl.CostEstimate(
            flops=flops, transcendentals=0, bytes_accessed=bytes_accessed),
    )(cur, target)
    return jnp.sum(out)   # sum of per-batch partials == global mean


# ---------------------------------------------------------------------------
# Module equivalent
# ---------------------------------------------------------------------------
class SlicingPallas:
    """JAX/Pallas port of Slicing_torch (forward pass)."""

    def __init__(self, key, layers_nchw, repeat_rate):
        self.repeat_rate = repeat_rate
        # Deterministic random slicing directions, one (C, C) matrix per layer,
        # row-normalized exactly as in update_slices().
        self.directions = []
        for i, l in enumerate(layers_nchw):
            c = l.shape[1]  # channels (NCHW)
            k = jax.random.fold_in(key, i)
            d = jax.random.normal(k, (c, c), dtype=jnp.float32)
            norm = jnp.sqrt(jnp.sum(jnp.square(d), axis=-1, keepdims=True))
            self.directions.append(d / norm)
        # Target stored UN-repeated (sorted projection only); the
        # repeat_interleave(repeat_rate**2) is applied inside the MSE kernel.
        self.target = [self._sorted_proj(l, i) for i, l in enumerate(layers_nchw)]

    def _sorted_proj(self, x_nchw, idx):
        b, c, h, w = x_nchw.shape
        # NCHW kept as-is: (B, C, HW) is exactly permute(0,2,3,1).view.permute(0,2,1)
        x = x_nchw.reshape(b, c, h * w).astype(jnp.float32)
        proj = sliced_projection(x, self.directions[idx])   # Pallas MXU, (B, C, HW)
        # TODO(synk): sort has no clean Mosaic/Pallas lowering; done with jnp.sort.
        return jnp.sort(proj, axis=-1)

    def __call__(self, inputs_nchw):
        rr = self.repeat_rate ** 2
        loss = jnp.float32(0.0)
        for idx, l in enumerate(inputs_nchw):
            cur = self._sorted_proj(l, idx)                  # (B, C, HW_in)
            loss = loss + mse_vs_expanded_target(cur, self.target[idx], rr)
        return loss


# ---------------------------------------------------------------------------
# Demo / self-check
# ---------------------------------------------------------------------------
if __name__ == "__main__":
    key = jax.random.PRNGKey(0)
    k1, k2, k3, k4, kd = jax.random.split(key, 5)
    repeat_rate = 2

    # Target feature layers (half spatial resolution; repeat_rate**2 compensates).
    tgt_layers = [
        jax.random.normal(k1, (2, 8, 8, 8), dtype=jnp.float32),    # NCHW
        jax.random.normal(k2, (2, 16, 4, 4), dtype=jnp.float32),   # NCHW
    ]
    # Forward input feature layers (full resolution, same channels).
    in_layers = [
        jax.random.normal(k3, (2, 8, 16, 16), dtype=jnp.float32),  # NCHW
        jax.random.normal(k4, (2, 16, 8, 8), dtype=jnp.float32),   # NCHW
    ]

    model = SlicingPallas(kd, tgt_layers, repeat_rate)
    loss = model(in_layers)
    jax.block_until_ready(loss)

    # Pure-JAX reference following the original PyTorch data path exactly.
    def ref_proj(x, d, r):
        b, c, h, w = x.shape
        t = jnp.transpose(x, (0, 2, 3, 1)).reshape(b, h * w, c)
        s = jnp.einsum("cd,bpd->bcp", d, t)
        s = jnp.sort(s, axis=-1)
        s = jnp.repeat(s, r * r, axis=-1)
        return s.reshape(b, -1)

    ref_loss = jnp.float32(0.0)
    for i in range(len(in_layers)):
        tgt = ref_proj(tgt_layers[i], model.directions[i], repeat_rate)
        cur = ref_proj(in_layers[i], model.directions[i], 1)
        ref_loss = ref_loss + jnp.mean((cur - tgt) ** 2)

    assert jnp.allclose(loss, ref_loss, rtol=1e-4, atol=1e-4), (loss, ref_loss)
    print("KERNEL_OK")
</pallas_src>

<mosaic_0001>
module attributes {stable_mosaic.version = 11 : i64} {
  func.func @_proj_kernel(%arg0: i32, %arg1: i32, %arg2: memref<8x8xf32, #tpu.memory_space<vmem>>, %arg3: memref<1x8x64xf32, #tpu.memory_space<vmem>>, %arg4: memref<1x8x64xf32, #tpu.memory_space<vmem>>) attributes {dimension_semantics = [#tpu.dimension_semantics<parallel>, #tpu.dimension_semantics<parallel>], iteration_bounds = array<i64: 2, 1>, scalar_prefetch = 0 : i64, scratch_operands = 0 : i64, tpu.core_type = #tpu.core_type<tc>, window_params = [{pipeline_mode = #tpu.pipeline_mode<synchronous>, transform_indices = @transform_0, window_bounds = array<i64: 8, 8>}, {transform_indices = @transform_1, window_bounds = array<i64: 1, 8, 64>}, {transform_indices = @transform_2, window_bounds = array<i64: 1, 8, 64>}]} {
    %c0 = arith.constant 0 : index
    %c0_0 = arith.constant 0 : index
    %0 = vector.load %arg2[%c0, %c0_0] : memref<8x8xf32, #tpu.memory_space<vmem>>, vector<8x8xf32>
    %c0_1 = arith.constant 0 : index
    %c0_2 = arith.constant 0 : index
    %c0_3 = arith.constant 0 : index
    %1 = vector.load %arg3[%c0_1, %c0_2, %c0_3] : memref<1x8x64xf32, #tpu.memory_space<vmem>>, vector<1x8x64xf32>
    %2 = vector.shape_cast %1 : vector<1x8x64xf32> to vector<8x64xf32>
    %cst = arith.constant dense<0.000000e+00> : vector<8x64xf32>
    %3 = tpu.matmul %0, %2, %cst {dimension_numbers = #tpu.dot_dimension_numbers<[1], [0], [0], [1], [0, 0, 1, 1], [], []>} : vector<8x8xf32>, vector<8x64xf32>, vector<8x64xf32> -> vector<8x64xf32>
    %c0_4 = arith.constant 0 : index
    %c0_5 = arith.constant 0 : index
    %c0_6 = arith.constant 0 : index
    %4 = vector.load %arg4[%c0_4, %c0_5, %c0_6] : memref<1x8x64xf32, #tpu.memory_space<vmem>>, vector<1x8x64xf32>
    %5 = vector.shape_cast %4 : vector<1x8x64xf32> to vector<8x64xf32>
    %6 = vector.shape_cast %3 : vector<8x64xf32> to vector<1x8x64xf32>
    tpu.vector_store %arg4[%c0_4, %c0_5, %c0_6], %6 {strides = array<i32>} : memref<1x8x64xf32, #tpu.memory_space<vmem>>, vector<1x8x64xf32>,
    return
  }
  func.func @transform_0(%arg0: i32, %arg1: i32) -> (i32, i32) {
    %c0_i32 = arith.constant 0 : i32
    %c0_i32_0 = arith.constant 0 : i32
    %c0_i32_1 = arith.constant 0 : i32
    return %c0_i32, %c0_i32_0 : i32, i32
  }
  func.func @transform_1(%arg0: i32, %arg1: i32) -> (i32, i32, i32) {
    %c0_i32 = arith.constant 0 : i32
    %c0_i32_0 = arith.constant 0 : i32
    return %arg0, %c0_i32, %arg1 : i32, i32, i32
  }
  func.func @transform_2(%arg0: i32, %arg1: i32) -> (i32, i32, i32) {
    %c0_i32 = arith.constant 0 : i32
    %c0_i32_0 = arith.constant 0 : i32
    return %arg0, %c0_i32, %arg1 : i32, i32, i32
  }
}

</mosaic_0001>

<llo_original>
// kernel: tpu_custom_call.1
$region0: #{tpu_custom_call.1}
  #allocation0 [shape = 'u32[]', space=smem, size = 0x4, offset = 0x4, fixed_abs, tag = 'smem constant byte address 0x4 - core index']
  #allocation1 [shape = 'u32[144,128]{1,0:T(1,128)}', space=vmem, size = 0x12000, scoped, tag = 'internal scratch']
  %s0 = inlined_call_operand.hbm [shape: f32[8,8], index: 0, kind: input, shape index: {}]
  %s1 = inlined_call_operand.hbm [shape: f32[2,8,64], index: 1, kind: input, shape index: {}]
  %s2 = inlined_call_operand.hbm [shape: f32[2,8,64], index: 2, kind: output, shape index: {}]
  %s3 = sld [smem:[#allocation0]]
  $region49: #{tpu_custom_call.1} parent=0
    _
  %s5 = ssub.s32 1, %s3
  %s6 = scalar_select 0, %s5, %s3
  $region1: #{tpu_custom_call.1} parent=0
    #allocation2 [shape = 'u8[4096]{0}', space=vmem, size = 0x1000, scoped, tag = 'input window, operand 0, single buffered']
    #allocation3 [shape = 's32[2]{0}', space=sflag, size = 0x8, scoped, tag = 'scoped memory for tpu_custom_call.1']
    #allocation4 [shape = 's32[2]{0}', space=sflag, size = 0x8, scoped, tag = 'scoped memory for tpu_custom_call.1']
    #allocation5 [shape = 'u8[8192]{0}', space=vmem, size = 0x2000, scoped, tag = 'input window, operand 1']
    #allocation6 [shape = 's32[2]{0}', space=sflag, size = 0x8, scoped, tag = 'scoped memory for tpu_custom_call.1']
    #allocation7 [shape = 'u8[8192]{0}', space=vmem, size = 0x2000, scoped, tag = 'output window, operand 0']
    %7 = vsyncpa [#allocation3], 0
    %8 = vsyncpa [#allocation6], 0
    %s9 = scalar_lea.sflag [#allocation6], 1
    %10 = vsyncpa %s9, 0
    %11 = vsyncpa [#allocation4], 0
    %s12 = scalar_lea.sflag [#allocation4], 1
    %13 = vsyncpa %s12, 0
    loop: start=0, step=1, limit=4
    $region2: #{tpu_custom_call.1} parent=1 // loop_pre_header
      _
    $region3: #{tpu_custom_call.1} parent=1 // loop_header
      %s15 = sphi 0, %s19
      %p16 = scmp.ge.s32.totalorder %s15, 4
      %s22 = sphi 0, %s34
      %s23 = sphi 0, %s30
      %s24 = sphi 0, %s22
      %s25 = sphi 0, %s23
      %s26 = sphi 0, %s24
      %s27 = sphi 0, %s25
      %s35 = sphi 0, %s35
      %s37 = sphi 0, %s35
      %s38 = sphi 0, %s37
      %s52 = sphi 0, %s38
      %s60 = sphi 0, %s62
      %s63 = sphi 0, %s60
      %s64 = sphi 0, %s63
      %s80 = sphi 0, %s64
      %s88 = sphi 0, %s90
      %s91 = sphi 0, %s88
      %s92 = sphi 0, %s91
      %s108 = sphi 0, %s92
    $region4: #{tpu_custom_call.1} parent=1 // loop_header_branch
      %18 = sbr.rel (%p16) target = $region8
    $region5: #{tpu_custom_call.1} parent=1 // loop_body
      %s20 = ssub.s32 %s15, 1
      %s21 = ssub.s32 %s15, 2
      %s28 = sadd.s32 1, %s23
      %p29 = scmp.ge.s32.totalorder %s28, 1
      %s30 = scalar_select %p29, 0, %s28
      %s31 = sadd.s32 1, %s22
      %s32 = scalar_select %p29, %s31, %s22
      %p33 = scmp.ge.s32.totalorder %s32, 2
      %s34 = scalar_select %p33, 0, %s32
      %s36 = sadd.s32 %s35, 1
      %p39 = scmp.eq.s32.totalorder %s15, 1
      %p40 = scmp.ne.s32.totalorder %s35, %s37
      %p41 = scmp.eq.s32.totalorder %s15, 0
      %p42 = por %p40, %p41
      %p43 = scmp.ne.s32.totalorder %s35, %s37
      %p44 = scmp.eq.s32.totalorder %s20, 1
      %p45 = por %p43, %p44
      %p46 = scmp.ne.s32.totalorder %s37, %s38
      %p47 = scmp.eq.s32.totalorder %s20, 0
      %p48 = por %p46, %p47
      %p49 = scmp.ne.s32.totalorder %s37, %s38
      %p50 = scmp.eq.s32.totalorder %s21, 1
      %p51 = por %p49, %p50
      %p53 = scmp.ne.s32.totalorder %s38, %s52
      %p54 = scmp.eq.s32.totalorder %s21, 0
      %p55 = por %p53, %p54
      %s56 = ssub.s32 %s22, %s34
      %s57 = ssub.s32 %s23, %s30
      %s58 = sor.u32 %s56, %s57
      %p59 = scmp.eq.s32.totalorder %s58, 0
      %s61 = sadd.s32 %s60, 1
      %s62 = scalar_select %p59, %s60, %s61
      %p65 = pneg %p59
      %p66 = scmp.eq.s32.totalorder %s15, 1
      %p67 = por %p65, %p66
      %p68 = scmp.ne.s32.totalorder %s60, %s63
      %p69 = scmp.eq.s32.totalorder %s15, 0
      %p70 = por %p68, %p69
      %p71 = scmp.ne.s32.totalorder %s60, %s63
      %p72 = scmp.eq.s32.totalorder %s20, 1
      %p73 = por %p71, %p72
      %p74 = scmp.ne.s32.totalorder %s63, %s64
      %p75 = scmp.eq.s32.totalorder %s20, 0
      %p76 = por %p74, %p75
      %p77 = scmp.ne.s32.totalorder %s63, %s64
      %p78 = scmp.eq.s32.totalorder %s21, 1
      %p79 = por %p77, %p78
      %p81 = scmp.ne.s32.totalorder %s64, %s80
      %p82 = scmp.eq.s32.totalorder %s21, 0
      %p83 = por %p81, %p82
      %s84 = ssub.s32 %s22, %s34
      %s85 = ssub.s32 %s23, %s30
      %s86 = sor.u32 %s84, %s85
      %p87 = scmp.eq.s32.totalorder %s86, 0
      %s89 = sadd.s32 %s88, 1
      %s90 = scalar_select %p87, %s88, %s89
      %p93 = pneg %p87
      %p94 = scmp.eq.s32.totalorder %s15, 1
      %p95 = por %p93, %p94
      %p96 = scmp.ne.s32.totalorder %s88, %s91
      %p97 = scmp.eq.s32.totalorder %s15, 0
      %p98 = por %p96, %p97
      %p99 = scmp.ne.s32.totalorder %s88, %s91
      %p100 = scmp.eq.s32.totalorder %s20, 1
      %p101 = por %p99, %p100
      %p102 = scmp.ne.s32.totalorder %s91, %s92
      %p103 = scmp.eq.s32.totalorder %s20, 0
      %p104 = por %p102, %p103
      %p105 = scmp.ne.s32.totalorder %s91, %s92
      %p106 = scmp.eq.s32.totalorder %s21, 1
      %p107 = por %p105, %p106
      %p109 = scmp.ne.s32.totalorder %s92, %s108
      %p110 = scmp.eq.s32.totalorder %s21, 0
      %p111 = por %p109, %p110
      %p112 = scmp.le.s32.totalorder 1, %s15
      %p113 = scmp.lt.s32.totalorder %s15, 3
      %p114 = pnand %p112, %p113
      %p115 = pneg %p114
      // Predicated region
      $region9: #{tpu_custom_call.1} parent=5 // pred_check
        _
      $region10: #{tpu_custom_call.1} parent=5 // pred_check_branch
        %117 = sbr.rel (%p114) target = $region12
      $region11: #{tpu_custom_call.1} parent=5 // pred_region
        %s118 = ssub.s32 %s15, 1
        // Predicated region
        $region13: #{tpu_custom_call.1} parent=11 // pred_check
          %p119 = pneg %p48
        $region14: #{tpu_custom_call.1} parent=11 // pred_check_branch
          %121 = sbr.rel (%p119) target = $region16
        $region15: #{tpu_custom_call.1} parent=11 // pred_region
          %s123 = ssub.s32 128, 128
          %124 = vsyncadd [#allocation3], %s123
          %s126 = sshll.u32 [#allocation2], 4
          %s127 = int_to_ptr.vmem [resolvable:$true] %s126
          %129 = dma.hbm_to_vmem [thread:$0]  %s0, 128, %s127, [#allocation3]
        $region16: #{tpu_custom_call.1} parent=11 // pred_fallthru
          _
      $region12: #{tpu_custom_call.1} parent=5 // pred_fallthru
        _
      %p130 = scmp.lt.s32.totalorder %s15, 2
      // Predicated region
      $region17: #{tpu_custom_call.1} parent=5 // pred_check
        %p131 = pneg %p130
      $region18: #{tpu_custom_call.1} parent=5 // pred_check_branch
        %133 = sbr.rel (%p131) target = $region20
      $region19: #{tpu_custom_call.1} parent=5 // pred_region
        // Predicated region
        $region21: #{tpu_custom_call.1} parent=19 // pred_check
          %p134 = pneg %p70
        $region22: #{tpu_custom_call.1} parent=19 // pred_check_branch
          %136 = sbr.rel (%p134) target = $region24
        $region23: #{tpu_custom_call.1} parent=19 // pred_region
          %s137 = sand.u32 %s60, 1
          %s138 = scalar_lea.sflag [#allocation6], %s137
          %s139 = sand.u32 %s60, 1
          %s140 = smul.addr %s139, 8
          %s141 = scalar_lea.vmem [#allocation5], %s140
          %s143 = ssub.s32 128, 128
          %144 = vsyncadd %s138, %s143
          %s145 = sadd.s32 %s23, %s22
          %s146 = smul.addr %s145, 128
          %s147 = scalar_lea.hbm %s1, %s146
          %s149 = sshll.u32 %s141, 4
          %s150 = int_to_ptr.vmem [resolvable:$true] %s149
          %152 = dma.hbm_to_vmem [thread:$0]  %s147, 128, %s150, %s138
        $region24: #{tpu_custom_call.1} parent=19 // pred_fallthru
          _
      $region20: #{tpu_custom_call.1} parent=5 // pred_fallthru
        _
      %p153 = scmp.le.s32.totalorder 1, %s15
      %p154 = scmp.lt.s32.totalorder %s15, 3
      %p155 = pnand %p153, %p154
      %p156 = pneg %p155
      // Predicated region
      $region25: #{tpu_custom_call.1} parent=5 // pred_check
        _
      $region26: #{tpu_custom_call.1} parent=5 // pred_check_branch
        %158 = sbr.rel (%p155) target = $region28
      $region27: #{tpu_custom_call.1} parent=5 // pred_region
        %s159 = ssub.s32 %s15, 1
        // Predicated region
        $region29: #{tpu_custom_call.1} parent=27 // pred_check
          %p160 = pneg %p48
        $region30: #{tpu_custom_call.1} parent=27 // pred_check_branch
          %162 = sbr.rel (%p160) target = $region32
        $region31: #{tpu_custom_call.1} parent=27 // pred_region
          %163 = dma.done [#allocation3], 128
        $region32: #{tpu_custom_call.1} parent=27 // pred_fallthru
          _
        %s164 = sand.u32 %s63, 1
        %s165 = scalar_lea.sflag [#allocation6], %s164
        %s166 = sand.u32 %s63, 1
        %s167 = smul.addr %s166, 8
        %s168 = scalar_lea.vmem [#allocation5], %s167
        // Predicated region
        $region33: #{tpu_custom_call.1} parent=27 // pred_check
          %p169 = pneg %p76
        $region34: #{tpu_custom_call.1} parent=27 // pred_check_branch
          %171 = sbr.rel (%p169) target = $region36
        $region35: #{tpu_custom_call.1} parent=27 // pred_region
          %172 = dma.done %s165, 128
        $region36: #{tpu_custom_call.1} parent=27 // pred_fallthru
          _
        %p173 = pneg %p48
        %p174 = pneg %p45
        %s175 = sand.u32 %s63, 1
        %s176 = scalar_lea.sflag [#allocation6], %s175
        %s177 = sand.u32 %s63, 1
        %s178 = smul.addr %s177, 8
        %s179 = scalar_lea.vmem [#allocation5], %s178
        %p180 = pneg %p76
        %p181 = pneg %p73
        %p182 = pneg %p104
        %p183 = pneg %p101
        %s184 = sand.u32 %s91, 1
        %s185 = scalar_lea.sflag [#allocation4], %s184
        %s186 = sand.u32 %s91, 1
        %s187 = smul.addr %s186, 8
        %s188 = scalar_lea.vmem [#allocation7], %s187
        %v189 = vld [vmem:[#allocation2] sm:$0xff]
        %v190 = vld [vmem:[%s168] sm:$0xff]
        %vm191 = vcmask 64512
        %v193 = vsel %vm191, %v189, 0
        %195 = vmatprep.subr.mxu0 0.0
        %196 = vmatpush1.msra.mxu0 0.0
        %197 = vmatprep.subr.mxu0 0.0
        %198 = vmatpush1.msra.mxu0 0.0
        %199 = vmatprep.subr.mxu0 0.0
        %200 = vmatpush1.msra.mxu0 0.0
        %201 = vmatprep.subr.mxu0 0.0
        %202 = vmatpush1.msra.mxu0 0.0
        %203 = vmatprep.subr.mxu0 0.0
        %204 = vmatpush1.msra.mxu0 0.0
        %205 = vmatprep.subr.mxu0 0.0
        %206 = vmatpush1.msra.mxu0 0.0
        %207 = vmatprep.subr.mxu0 0.0
        %208 = vmatpush1.msra.mxu0 0.0
        %209 = vmatprep.subr.mxu0 0.0
        %210 = vmatpush1.msra.mxu0 0.0
        %211 = vmatprep.subr.mxu0 0.0
        %212 = vmatpush1.msra.mxu0 0.0
        %213 = vmatprep.subr.mxu0 0.0
        %214 = vmatpush1.msra.mxu0 0.0
        %215 = vmatprep.subr.mxu0 0.0
        %216 = vmatpush1.msra.mxu0 0.0
        %217 = vmatprep.subr.mxu0 0.0
        %218 = vmatpush1.msra.mxu0 0.0
        %219 = vmatprep.subr.mxu0 0.0
        %220 = vmatpush1.msra.mxu0 0.0
        %221 = vmatprep.subr.mxu0 0.0
        %222 = vmatpush1.msra.mxu0 0.0
        %223 = vmatprep.subr.mxu0 0.0
        %224 = vmatpush1.msra.mxu0 0.0
        %225 = vmatprep.subr.mxu0 0.0
        %226 = vmatpush1.msra.mxu0 %v190
        %227 = vmatprep.subr.mxu0 0.0
        %228 = vmatpush2.msra.mxu0 0.0
        %229 = vmatprep.subr.mxu0 0.0
        %230 = vmatpush2.msra.mxu0 0.0
        %231 = vmatprep.subr.mxu0 0.0
        %232 = vmatpush2.msra.mxu0 0.0
        %233 = vmatprep.subr.mxu0 0.0
        %234 = vmatpush2.msra.mxu0 0.0
        %235 = vmatprep.subr.mxu0 0.0
        %236 = vmatpush2.msra.mxu0 0.0
        %237 = vmatprep.subr.mxu0 0.0
        %238 = vmatpush2.msra.mxu0 0.0
        %239 = vmatprep.subr.mxu0 0.0
        %240 = vmatpush2.msra.mxu0 0.0
        %241 = vmatprep.subr.mxu0 0.0
        %242 = vmatpush2.msra.mxu0 0.0
        %243 = vmatprep.subr.mxu0 0.0
        %244 = vmatpush2.msra.mxu0 0.0
        %245 = vmatprep.subr.mxu0 0.0
        %246 = vmatpush2.msra.mxu0 0.0
        %247 = vmatprep.subr.mxu0 0.0
        %248 = vmatpush2.msra.mxu0 0.0
        %249 = vmatprep.subr.mxu0 0.0
        %250 = vmatpush2.msra.mxu0 0.0
        %251 = vmatprep.subr.mxu0 0.0
        %252 = vmatpush2.msra.mxu0 0.0
        %253 = vmatprep.subr.mxu0 0.0
        %254 = vmatpush2.msra.mxu0 0.0
        %255 = vmatprep.subr.mxu0 0.0
        %256 = vmatpush2.msra.mxu0 0.0
        %257 = vmatprep.subr.mxu0 0.0
        %258 = vmatpush2.msra.mxu0 0.0
        %259 = vmatprep.mubr.f32.mxu0 0.0
        %260 = vmatmul.mubr.f32.gmra.mxu0 %v193
        %v261 = vpop.f32.mrf.mxu0
        %v262 = vadd.f32 0.0, %v261
        %v263 = vpop.f32.mrf.mxu0
        %264 = vdwg.mxu0
        %vm265 = vcmask 523264
        %266 = vst.msk [vmem:[%s188] sm:$0xff] %vm265, %v262
        %s267 = sand.u32 %s91, 1
        %s268 = scalar_lea.sflag [#allocation4], %s267
        %s269 = sand.u32 %s91, 1
        %s270 = smul.addr %s269, 8
        %s271 = scalar_lea.vmem [#allocation7], %s270
        // Predicated region
        $region37: #{tpu_custom_call.1} parent=27 // pred_check
          %p272 = pneg %p101
        $region38: #{tpu_custom_call.1} parent=27 // pred_check_branch
          %274 = sbr.rel (%p272) target = $region40
        $region39: #{tpu_custom_call.1} parent=27 // pred_region
          %s276 = ssub.s32 128, 128
          %277 = vsyncadd %s268, %s276
          %s278 = sadd.s32 %s25, %s24
          %s279 = smul.addr %s278, 128
          %s280 = scalar_lea.hbm %s2, %s279
          %s282 = sshll.u32 %s271, 4
          %s283 = int_to_ptr.vmem [resolvable:$true] %s282
          %285 = dma.vmem_to_hbm [thread:$0]  %s283, 128, %s280, %s268
        $region40: #{tpu_custom_call.1} parent=27 // pred_fallthru
          _
      $region28: #{tpu_custom_call.1} parent=5 // pred_fallthru
        _
      %p286 = scmp.le.s32.totalorder 2, %s15
      // Predicated region
      $region41: #{tpu_custom_call.1} parent=5 // pred_check
        %p287 = pneg %p286
      $region42: #{tpu_custom_call.1} parent=5 // pred_check_branch
        %289 = sbr.rel (%p287) target = $region44
      $region43: #{tpu_custom_call.1} parent=5 // pred_region
        %s290 = ssub.s32 %s15, 2
        // Predicated region
        $region45: #{tpu_custom_call.1} parent=43 // pred_check
          %p291 = pneg %p107
        $region46: #{tpu_custom_call.1} parent=43 // pred_check_branch
          %293 = sbr.rel (%p291) target = $region48
        $region47: #{tpu_custom_call.1} parent=43 // pred_region
          %s294 = sand.u32 %s92, 1
          %s295 = scalar_lea.sflag [#allocation4], %s294
          %s296 = sand.u32 %s92, 1
          %s297 = smul.addr %s296, 8
          %s298 = scalar_lea.vmem [#allocation7], %s297
          %299 = dma.done %s295, 128
        $region48: #{tpu_custom_call.1} parent=43 // pred_fallthru
          _
      $region44: #{tpu_custom_call.1} parent=5 // pred_fallthru
        _
    $region6: #{tpu_custom_call.1} parent=1 // loop_footer
      %s19 = sadd.s32 1, %s15
    $region7: #{tpu_custom_call.1} parent=1 // loop_footer_branch
      %14 = sbr.rel target = $region3
    $region8: #{tpu_custom_call.1} parent=1 // loop_exit
      _
    %300 = vsyncpa [#allocation3], 1
    %s301 = scalar_lea.sflag [#allocation3], 1
    %302 = vsyncpa %s301, 1
    %303 = vsyncpa [#allocation6], 1
    %s304 = scalar_lea.sflag [#allocation6], 1
    %305 = vsyncpa %s304, 1
    %306 = vsyncpa [#allocation4], 1
    %s307 = scalar_lea.sflag [#allocation4], 1
    %308 = vsyncpa %s307, 1

</llo_original>
